<compile_context>
chip_gen: v5e
topology: v5e:2x2
jax: 0.10.0
libtpu: 0.0.40
codegen_flags: <defaults>
</compile_context>

<pallas_src>
import functools

import jax
import jax.numpy as jnp
from jax import lax
from jax.experimental import pallas as pl
from jax.experimental.pallas import tpu as pltpu

_EPS = 1e-12        # matches torch.nn.functional.normalize(eps=1e-12)
_NEG_INF = -1e30    # finite "minus infinity" for masked (padded) logits


def _round_up(x, m):
    return ((x + m - 1) // m) * m


def _pad2d(x, rows, cols):
    r, c = x.shape
    if r == rows and c == cols:
        return x
    return jnp.pad(x, ((0, rows - r), (0, cols - c)))


def _vmem_capacity_bytes():
    """Physical VMEM per TensorCore, with a conservative fallback."""
    try:
        cap = int(pltpu.get_tpu_info().vmem_capacity_bytes)
        if cap > 0:
            return cap
    except Exception:
        pass
    return 64 * 1024 * 1024   # v7x per-TC size: safe lower bound everywhere


# --------------------- pre-pass A: normalize keys + transpose ---------------------

def _normalize_transpose_kernel(x_ref, out_ref):
    """L2-normalize rows of a (kr, D) tile and store it transposed (D, kr)."""
    x = x_ref[...].astype(jnp.float32)
    inv = lax.rsqrt(jnp.maximum(jnp.sum(x * x, axis=-1, keepdims=True),
                                jnp.float32(_EPS * _EPS)))          # EUP rsqrt
    out_ref[...] = (x * inv).T.astype(out_ref.dtype)


def _normalize_transpose(keys, k_pad, d_pad, out_dtype, budget):
    keys_p = _pad2d(keys, k_pad, d_pad)
    kr = 256 if (k_pad % 256 == 0) else 128
    kb = keys.dtype.itemsize
    cp_b = jnp.dtype(out_dtype).itemsize

    def fp(kr_):
        return (2 * kr_ * d_pad * kb          # input rows, double-buffered
                + 2 * d_pad * kr_ * cp_b      # transposed output, double-buffered
                + 2 * kr_ * d_pad * 4)        # f32 temporaries

    if fp(kr) > budget and kr > 128:
        kr = 128
    vmem = int(min(budget, max(2 * fp(kr), 16 * 1024 * 1024)))

    return pl.pallas_call(
        _normalize_transpose_kernel,
        out_shape=jax.ShapeDtypeStruct((d_pad, k_pad), out_dtype),
        grid_spec=pltpu.PrefetchScalarGridSpec(
            num_scalar_prefetch=0,
            grid=(k_pad // kr,),
            in_specs=[pl.BlockSpec((kr, d_pad), lambda i: (i, 0))],
            out_specs=pl.BlockSpec((d_pad, kr), lambda i: (0, i)),
        ),
        compiler_params=pltpu.CompilerParams(
            dimension_semantics=("parallel",), vmem_limit_bytes=vmem),
    )(keys_p)


# ------------- pre-pass B: normalize query (with 1/T folded) + positive logit -----

def _prep_query_kernel(q_ref, p_ref, qn_ref, pos_ref, *, inv_temperature):
    q = q_ref[...].astype(jnp.float32)
    p = p_ref[...].astype(jnp.float32)
    eps2 = jnp.float32(_EPS * _EPS)
    q_inv = lax.rsqrt(jnp.maximum(jnp.sum(q * q, axis=-1, keepdims=True), eps2))
    p_inv = lax.rsqrt(jnp.maximum(jnp.sum(p * p, axis=-1, keepdims=True), eps2))
    qn = q * (q_inv * jnp.float32(inv_temperature))   # fold 1/T into the query
    pn = p * p_inv
    qn_ref[...] = qn.astype(qn_ref.dtype)
    # per-sample positive logit (already scaled by 1/T via qn)
    pos_ref[...] = jnp.sum(qn * pn, axis=-1, keepdims=True)


# ------------------------------ main InfoNCE kernel ------------------------------

def _info_nce_kernel(qn_ref, pos_ref, kt_ref, out_ref, m_sc, l_sc, *,
                     num_valid_cols, block_cols, pos_in_lse):
    """Online (flash-style) logsumexp over key column blocks.

    qn_ref:  (tm, D)  normalized query rows, pre-scaled by 1/temperature.
    pos_ref: (tm, 1)  per-sample positive logit (already scaled by 1/T).
    kt_ref:  (D, tn)  pre-normalized, pre-transposed key columns.
    out_ref: (tm, 1)  per-sample loss, written at the last column block.
    pos_in_lse: True  -> unpaired negatives: loss = lse([pos, negs]) - pos
                False -> self-negatives:     loss = lse(q @ p.T row)  - diag
    """
    j = pl.program_id(1)

    @pl.when(j == 0)
    def _init():
        if pos_in_lse:
            m_sc[...] = pos_ref[...]
            l_sc[...] = jnp.ones(l_sc.shape, jnp.float32)
        else:
            m_sc[...] = jnp.full(m_sc.shape, _NEG_INF, jnp.float32)
            l_sc[...] = jnp.zeros(l_sc.shape, jnp.float32)

    # logits already include the 1/temperature scale (folded into qn).
    logits = jnp.dot(qn_ref[...], kt_ref[...],
                     preferred_element_type=jnp.float32)            # (tm, tn)

    if num_valid_cols % block_cols != 0:        # static: padded key columns exist
        col = j * block_cols + lax.broadcasted_iota(jnp.int32, (1, block_cols), 1)
        logits = jnp.where(col < num_valid_cols, logits, jnp.float32(_NEG_INF))

    m_prev = m_sc[...]
    m_new = jnp.maximum(m_prev, jnp.max(logits, axis=-1, keepdims=True))
    l_sc[...] = (jnp.exp(m_prev - m_new) * l_sc[...]
                 + jnp.sum(jnp.exp(logits - m_new), axis=-1, keepdims=True))
    m_sc[...] = m_new

    @pl.when(j == pl.num_programs(1) - 1)
    def _finalize():
        out_ref[...] = m_sc[...] + jnp.log(l_sc[...]) - pos_ref[...]


def _info_nce_per_sample(query, positive_key, keys, temperature, pos_in_lse,
                         bf16_matmul=False):
    n, d = query.shape
    k = keys.shape[0]

    compute_dtype = (jnp.bfloat16
                     if (query.dtype == jnp.bfloat16 or bf16_matmul)
                     else jnp.float32)
    cp_b = jnp.dtype(compute_dtype).itemsize
    in_b = query.dtype.itemsize

    d_pad = _round_up(d, 128)
    row_align = 16 if compute_dtype == jnp.bfloat16 else 8

    vmem_cap = _vmem_capacity_bytes()
    budget = max(vmem_cap - 8 * 1024 * 1024, 24 * 1024 * 1024)

    # ---- row tile: big enough to amortize key streaming (roofline), but keep
    #      at least 2 row tiles when N permits so the "parallel" axis shards
    #      across both v7x TensorCores.
    TM_CAP = 512
    if n <= row_align:
        tm = _round_up(n, row_align)
    elif n <= 2 * TM_CAP:
        tm = min(TM_CAP, _round_up(-(-n // 2), row_align))   # ~two row tiles
    else:
        tm = TM_CAP

    # ---- key-column tile: whole keys^T resident in VMEM when it fits (keys
    #      then read from HBM exactly once); otherwise stream column blocks.
    tn = _round_up(k, 128)

    def main_fp(tm_, tn_):
        return (2 * tm_ * d_pad * cp_b        # qn row tile, double-buffered
                + 2 * d_pad * tn_ * cp_b      # keys^T tile, double-buffered
                + 4 * tm_ * tn_ * 4           # logits / exp temporaries
                + 8 * tm_ * 128 * 4)          # (tm,1) pos/out/m/l, lane-padded

    def prep_fp(tm_):
        return (2 * 2 * tm_ * d_pad * in_b    # q + p tiles, double-buffered
                + 2 * tm_ * d_pad * cp_b      # qn output, double-buffered
                + 3 * tm_ * d_pad * 4         # f32 temporaries
                + 4 * tm_ * 128 * 4)          # pos output

    while main_fp(tm, tn) > budget and tn > 128:
        tn = max(128, _round_up(tn // 2, 128))
    while max(main_fp(tm, tn), prep_fp(tm)) > budget and tm > row_align:
        tm = max(row_align, _round_up(tm // 2, row_align))

    n_pad = _round_up(n, tm)
    k_pad = _round_up(k, tn)

    # -------- pre-pass A: normalize + transpose keys once (compute dtype) ----
    keys_t = _normalize_transpose(keys, k_pad, d_pad, compute_dtype, budget)

    # -------- pre-pass B: normalized (and 1/T-scaled) query + positive logit --
    q_p = _pad2d(query, n_pad, d_pad)
    p_p = _pad2d(positive_key, n_pad, d_pad)
    vmem_prep = int(min(budget, max(2 * prep_fp(tm), 16 * 1024 * 1024)))
    qn, pos = pl.pallas_call(
        functools.partial(_prep_query_kernel, inv_temperature=1.0 / temperature),
        out_shape=(jax.ShapeDtypeStruct((n_pad, d_pad), compute_dtype),
                   jax.ShapeDtypeStruct((n_pad, 1), jnp.float32)),
        grid_spec=pltpu.PrefetchScalarGridSpec(
            num_scalar_prefetch=0,
            grid=(n_pad // tm,),
            in_specs=[pl.BlockSpec((tm, d_pad), lambda i: (i, 0)),
                      pl.BlockSpec((tm, d_pad), lambda i: (i, 0))],
            out_specs=[pl.BlockSpec((tm, d_pad), lambda i: (i, 0)),
                       pl.BlockSpec((tm, 1), lambda i: (i, 0))],
        ),
        compiler_params=pltpu.CompilerParams(
            dimension_semantics=("parallel",), vmem_limit_bytes=vmem_prep),
    )(q_p, p_p)

    # ------------------------------ main kernel ------------------------------
    vmem_main = int(min(budget, max(2 * main_fp(tm, tn), 16 * 1024 * 1024)))
    kernel = functools.partial(
        _info_nce_kernel,
        num_valid_cols=k, block_cols=tn, pos_in_lse=pos_in_lse)

    out = pl.pallas_call(
        kernel,
        out_shape=jax.ShapeDtypeStruct((n_pad, 1), jnp.float32),
        grid_spec=pltpu.PrefetchScalarGridSpec(
            num_scalar_prefetch=0,
            grid=(n_pad // tm, k_pad // tn),
            in_specs=[
                pl.BlockSpec((tm, d_pad), lambda i, j: (i, 0)),   # qn rows
                pl.BlockSpec((tm, 1), lambda i, j: (i, 0)),       # positive logit
                pl.BlockSpec((d_pad, tn), lambda i, j: (0, j)),   # keys^T cols
            ],
            out_specs=pl.BlockSpec((tm, 1), lambda i, j: (i, 0)),
            scratch_shapes=[
                pltpu.VMEM((tm, 1), jnp.float32),   # running max m
                pltpu.VMEM((tm, 1), jnp.float32),   # running sum l
            ],
        ),
        compiler_params=pltpu.CompilerParams(
            dimension_semantics=("parallel", "arbitrary"),
            vmem_limit_bytes=vmem_main,
        ),
    )(qn, pos, keys_t)

    return out[:n, 0]


# ----------------------------------- wrapper -------------------------------------

class InfoNCE:
    """JAX/Pallas port of the PyTorch InfoNCE module (forward pass)."""

    def __init__(self, temperature=0.1, reduction="mean", negative_mode="unpaired",
                 bf16_matmul=False):
        if reduction not in ("none", "sum", "mean"):
            raise ValueError("reduction must be one of ['none', 'sum', 'mean'].")
        self.temperature = float(temperature)
        self.reduction = reduction
        self.negative_mode = negative_mode
        self.bf16_matmul = bool(bf16_matmul)   # bf16 MXU operands even for f32 inputs

    def __call__(self, query, positive_key, negative_keys=None):
        if query.shape[0] != positive_key.shape[0]:
            raise ValueError("<query> and <positive_key> must have the same "
                             "number of samples.")
        if query.shape[-1] != positive_key.shape[-1]:
            raise ValueError("Vectors of <query> and <positive_key> should have "
                             "the same number of components.")
        if negative_keys is not None and query.shape[-1] != negative_keys.shape[-1]:
            raise ValueError("Vectors of <query> and <negative_keys> should have "
                             "the same number of components.")
        # TODO(synk): complex-valued logits (torch.abs path) not implemented.

        if negative_keys is not None:
            if self.negative_mode == "paired":
                if query.shape[0] != negative_keys.shape[0]:
                    raise ValueError("If negative_mode == 'paired', then "
                                     "<negative_keys> must have the same number "
                                     "of samples as <query>.")
                # TODO(synk): 'paired' negative mode ((N, M, D) batched negatives)
                # not implemented as a Pallas kernel.
                raise NotImplementedError("Only negative_mode='unpaired' supported.")
            per_sample = _info_nce_per_sample(
                query, positive_key, negative_keys,
                temperature=self.temperature, pos_in_lse=True,
                bf16_matmul=self.bf16_matmul)
        else:
            # Other positives act as negatives: logits = qn @ pn.T, labels=arange.
            per_sample = _info_nce_per_sample(
                query, positive_key, positive_key,
                temperature=self.temperature, pos_in_lse=False,
                bf16_matmul=self.bf16_matmul)

        if self.reduction == "mean":
            return jnp.mean(per_sample)
        if self.reduction == "sum":
            return jnp.sum(per_sample)
        return per_sample


# ------------------------------ pure-JAX reference --------------------------------

def _info_nce_ref(query, positive_key, negative_keys=None,
                  temperature=0.1, reduction="mean"):
    def norm(x):
        nrm = jnp.sqrt(jnp.sum(x * x, axis=-1, keepdims=True))
        return x / jnp.maximum(nrm, 1e-12)

    q, p = norm(query.astype(jnp.float32)), norm(positive_key.astype(jnp.float32))
    if negative_keys is not None:
        nk = norm(negative_keys.astype(jnp.float32))
        pos = jnp.sum(q * p, axis=-1, keepdims=True)
        neg = q @ nk.T
        logits = jnp.concatenate([pos, neg], axis=-1) / temperature
        labels = jnp.zeros((q.shape[0],), dtype=jnp.int32)
    else:
        logits = (q @ p.T) / temperature
        labels = jnp.arange(q.shape[0], dtype=jnp.int32)
    lse = jax.scipy.special.logsumexp(logits, axis=-1)
    picked = jnp.take_along_axis(logits, labels[:, None], axis=-1)[:, 0]
    per = lse - picked
    if reduction == "mean":
        return jnp.mean(per)
    if reduction == "sum":
        return jnp.sum(per)
    return per


# ------------------------------------- main ---------------------------------------

if __name__ == "__main__":
    key = jax.random.PRNGKey(0)
    k1, k2, k3 = jax.random.split(key, 3)

    batch_size, num_negative, embedding_size = 8, 16, 32
    query = jax.random.normal(k1, (batch_size, embedding_size), jnp.float32)
    positive_key = jax.random.normal(k2, (batch_size, embedding_size), jnp.float32)
    negative_keys = jax.random.normal(k3, (num_negative, embedding_size), jnp.float32)

    loss_mean = InfoNCE(temperature=0.1, reduction="mean", negative_mode="unpaired")
    loss_none = InfoNCE(temperature=0.1, reduction="none", negative_mode="unpaired")
    loss_bf16 = InfoNCE(temperature=0.1, reduction="mean", negative_mode="unpaired",
                        bf16_matmul=True)

    # Path 1: explicit (unpaired) negatives, mean reduction (f32 MXU operands).
    out1 = loss_mean(query, positive_key, negative_keys)
    jax.block_until_ready(out1)
    ref1 = _info_nce_ref(query, positive_key, negative_keys)

    # Path 2: no explicit negatives (other positives act as negatives).
    out2 = loss_mean(query, positive_key, None)
    jax.block_until_ready(out2)
    ref2 = _info_nce_ref(query, positive_key, None)

    # Path 3: per-sample (reduction='none') with explicit negatives.
    out3 = loss_none(query, positive_key, negative_keys)
    jax.block_until_ready(out3)
    ref3 = _info_nce_ref(query, positive_key, negative_keys, reduction="none")

    # Path 4: bf16 MXU operands for f32 inputs (perf mode) — loose tolerance.
    out4 = loss_bf16(query, positive_key, negative_keys)
    jax.block_until_ready(out4)

    assert jnp.allclose(out1, ref1, rtol=1e-4, atol=1e-4), (out1, ref1)
    assert jnp.allclose(out2, ref2, rtol=1e-4, atol=1e-4), (out2, ref2)
    assert jnp.allclose(out3, ref3, rtol=1e-4, atol=1e-4), (out3, ref3)
    assert jnp.allclose(out4, ref1, rtol=8e-2, atol=8e-2), (out4, ref1)

    print("KERNEL_OK")
</pallas_src>

<mosaic_0001>
module attributes {stable_mosaic.version = 11 : i64} {
  func.func @_normalize_transpose_kernel(%arg0: i32, %arg1: memref<128x128xf32, #tpu.memory_space<vmem>>, %arg2: memref<128x128xf32, #tpu.memory_space<vmem>>) attributes {dimension_semantics = [#tpu.dimension_semantics<parallel>], iteration_bounds = array<i64: 1>, scalar_prefetch = 0 : i64, scratch_operands = 0 : i64, tpu.core_type = #tpu.core_type<tc>, window_params = [{transform_indices = @transform_0, window_bounds = array<i64: 128, 128>}, {transform_indices = @transform_1, window_bounds = array<i64: 128, 128>}]} {
    %c0 = arith.constant 0 : index
    %c0_0 = arith.constant 0 : index
    %0 = vector.load %arg1[%c0, %c0_0] : memref<128x128xf32, #tpu.memory_space<vmem>>, vector<128x128xf32>
    %1 = arith.mulf %0, %0 : vector<128x128xf32>
    %cst = arith.constant dense<0.000000e+00> : vector<128xf32>
    %2 = vector.multi_reduction <add>, %1, %cst [1] : vector<128x128xf32> to vector<128xf32>
    %3 = vector.shape_cast %2 : vector<128xf32> to vector<128x1xf32>
    %cst_1 = arith.constant 1.000000e-24 : f32
    %4 = vector.broadcast %cst_1 : f32 to vector<128x1xf32>
    %5 = arith.maximumf %3, %4 : vector<128x1xf32>
    %6 = math.rsqrt %5 : vector<128x1xf32>
    %7 = vector.broadcast %6 : vector<128x1xf32> to vector<128x128xf32>
    %8 = arith.mulf %0, %7 : vector<128x128xf32>
    %9 = tpu.transpose %8, [1, 0] : vector<128x128xf32> -> vector<128x128xf32>
    %c0_2 = arith.constant 0 : index
    %c0_3 = arith.constant 0 : index
    %10 = vector.load %arg2[%c0_2, %c0_3] : memref<128x128xf32, #tpu.memory_space<vmem>>, vector<128x128xf32>
    tpu.vector_store %arg2[%c0_2, %c0_3], %9 {strides = array<i32>} : memref<128x128xf32, #tpu.memory_space<vmem>>, vector<128x128xf32>,
    return
  }
  func.func @transform_0(%arg0: i32) -> (i32, i32) {
    %c0_i32 = arith.constant 0 : i32
    %c0_i32_0 = arith.constant 0 : i32
    return %arg0, %c0_i32 : i32, i32
  }
  func.func @transform_1(%arg0: i32) -> (i32, i32) {
    %c0_i32 = arith.constant 0 : i32
    %c0_i32_0 = arith.constant 0 : i32
    return %c0_i32, %arg0 : i32, i32
  }
}

</mosaic_0001>

<llo_original>
// kernel: tpu_custom_call.1
$region0: #{tpu_custom_call.1}
  #allocation0 [shape = 'u32[]', space=smem, size = 0x4, offset = 0x4, fixed_abs, tag = 'smem constant byte address 0x4 - core index']
  #allocation1 [shape = 'u32[72,128]{1,0:T(1,128)}', space=vmem, size = 0x9000, scoped, tag = 'internal scratch']
  %s0 = inlined_call_operand.hbm [shape: f32[128,128], index: 0, kind: input, shape index: {}]
  %s1 = inlined_call_operand.hbm [shape: f32[128,128], index: 1, kind: output, shape index: {}]
  %s2 = sld [smem:[#allocation0]]
  $region18: #{tpu_custom_call.1} parent=0
    _
  %s4 = ssub.s32 1, %s2
  %s5 = scalar_select 0, %s4, %s2
  $region1: #{tpu_custom_call.1} parent=0
    #allocation2 [shape = 'u8[65536]{0}', space=vmem, size = 0x10000, scoped, tag = 'input window, operand 0, single buffered']
    #allocation3 [shape = 's32[1]{0}', space=sflag, size = 0x4, scoped, tag = 'scoped memory for tpu_custom_call.1']
    #allocation4 [shape = 's32[1]{0}', space=sflag, size = 0x4, scoped, tag = 'scoped memory for tpu_custom_call.1']
    #allocation5 [shape = 'u8[65536]{0}', space=vmem, size = 0x10000, scoped, tag = 'output window, operand 0, single buffered']
    %6 = vsyncpa [#allocation3], 0
    %7 = vsyncpa [#allocation4], 0
    // Predicated region
    $region2: #{tpu_custom_call.1} parent=1 // pred_check
      _
    $region3: #{tpu_custom_call.1} parent=1 // pred_check_branch
      %9 = sbr.rel (0) target = $region5
    $region4: #{tpu_custom_call.1} parent=1 // pred_region
      %11 = vsyncadd [#allocation3], 0
      %s12 = sshll.u32 %s0, 4
      %s13 = int_to_ptr.hbm [resolvable:$true] %s12
      %s14 = sshll.u32 [#allocation2], 4
      %s15 = int_to_ptr.vmem [resolvable:$true] %s14
      %20 = dma.hbm_to_vmem [thread:$0]  %s13, 2048, %s15, [#allocation3], 128, 128, 8
    $region5: #{tpu_custom_call.1} parent=1 // pred_fallthru
      _
    // Predicated region
    $region6: #{tpu_custom_call.1} parent=1 // pred_check
      _
    $region7: #{tpu_custom_call.1} parent=1 // pred_check_branch
      %22 = sbr.rel (0) target = $region9
    $region8: #{tpu_custom_call.1} parent=1 // pred_region
      %24 = dma.done [#allocation3], 2048
    $region9: #{tpu_custom_call.1} parent=1 // pred_fallthru
      _
    %v25 = vld [vmem:[#allocation2] sm:$0xff]
    %v26 = vld [vmem:[#allocation2 + $0x8] sm:$0xff]
    %v27 = vld [vmem:[#allocation2 + $0x10] sm:$0xff]
    %v28 = vld [vmem:[#allocation2 + $0x18] sm:$0xff]
    %v29 = vld [vmem:[#allocation2 + $0x20] sm:$0xff]
    %v30 = vld [vmem:[#allocation2 + $0x28] sm:$0xff]
    %v31 = vld [vmem:[#allocation2 + $0x30] sm:$0xff]
    %v32 = vld [vmem:[#allocation2 + $0x38] sm:$0xff]
    %v33 = vld [vmem:[#allocation2 + $0x40] sm:$0xff]
    %v34 = vld [vmem:[#allocation2 + $0x48] sm:$0xff]
    %v35 = vld [vmem:[#allocation2 + $0x50] sm:$0xff]
    %v36 = vld [vmem:[#allocation2 + $0x58] sm:$0xff]
    %v37 = vld [vmem:[#allocation2 + $0x60] sm:$0xff]
    %v38 = vld [vmem:[#allocation2 + $0x68] sm:$0xff]
    %v39 = vld [vmem:[#allocation2 + $0x70] sm:$0xff]
    %v40 = vld [vmem:[#allocation2 + $0x78] sm:$0xff]
    %v41 = vmul.f32 %v25, %v25
    %v42 = vmul.f32 %v26, %v26
    %v43 = vmul.f32 %v27, %v27
    %v44 = vmul.f32 %v28, %v28
    %v45 = vmul.f32 %v29, %v29
    %v46 = vmul.f32 %v30, %v30
    %v47 = vmul.f32 %v31, %v31
    %v48 = vmul.f32 %v32, %v32
    %v49 = vmul.f32 %v33, %v33
    %v50 = vmul.f32 %v34, %v34
    %v51 = vmul.f32 %v35, %v35
    %v52 = vmul.f32 %v36, %v36
    %v53 = vmul.f32 %v37, %v37
    %v54 = vmul.f32 %v38, %v38
    %v55 = vmul.f32 %v39, %v39
    %v56 = vmul.f32 %v40, %v40
    %57 = vadd.xlane.f32.xlu0 %v41
    %v58 = vpop.xlane.xlu0 %57
    %59 = vadd.xlane.f32.xlu0 %v42
    %v60 = vpop.xlane.xlu0 %59
    %61 = vadd.xlane.f32.xlu0 %v43
    %v62 = vpop.xlane.xlu0 %61
    %63 = vadd.xlane.f32.xlu0 %v44
    %v64 = vpop.xlane.xlu0 %63
    %65 = vadd.xlane.f32.xlu0 %v45
    %v66 = vpop.xlane.xlu0 %65
    %67 = vadd.xlane.f32.xlu0 %v46
    %v68 = vpop.xlane.xlu0 %67
    %69 = vadd.xlane.f32.xlu0 %v47
    %v70 = vpop.xlane.xlu0 %69
    %71 = vadd.xlane.f32.xlu0 %v48
    %v72 = vpop.xlane.xlu0 %71
    %73 = vadd.xlane.f32.xlu0 %v49
    %v74 = vpop.xlane.xlu0 %73
    %75 = vadd.xlane.f32.xlu0 %v50
    %v76 = vpop.xlane.xlu0 %75
    %77 = vadd.xlane.f32.xlu0 %v51
    %v78 = vpop.xlane.xlu0 %77
    %79 = vadd.xlane.f32.xlu0 %v52
    %v80 = vpop.xlane.xlu0 %79
    %81 = vadd.xlane.f32.xlu0 %v53
    %v82 = vpop.xlane.xlu0 %81
    %83 = vadd.xlane.f32.xlu0 %v54
    %v84 = vpop.xlane.xlu0 %83
    %85 = vadd.xlane.f32.xlu0 %v55
    %v86 = vpop.xlane.xlu0 %85
    %87 = vadd.xlane.f32.xlu0 %v56
    %v88 = vpop.xlane.xlu0 %87
    %v89 = vmax.f32 %v58, 1e-24
    %v90 = vmax.f32 %v60, 1e-24
    %v91 = vmax.f32 %v62, 1e-24
    %v92 = vmax.f32 %v64, 1e-24
    %v93 = vmax.f32 %v66, 1e-24
    %v94 = vmax.f32 %v68, 1e-24
    %v95 = vmax.f32 %v70, 1e-24
    %v96 = vmax.f32 %v72, 1e-24
    %v97 = vmax.f32 %v74, 1e-24
    %v98 = vmax.f32 %v76, 1e-24
    %v99 = vmax.f32 %v78, 1e-24
    %v100 = vmax.f32 %v80, 1e-24
    %v101 = vmax.f32 %v82, 1e-24
    %v102 = vmax.f32 %v84, 1e-24
    %v103 = vmax.f32 %v86, 1e-24
    %v104 = vmax.f32 %v88, 1e-24
    %v105 = vrsqrt.pop %v89
    %v106 = vmul.f32 %v105, %v89
    %v107 = vmul.f32 %v106, %v105
    %v108 = vmul.f32 0.5, %v107
    %v109 = vsub.f32 1.5, %v108
    %v110 = vmul.f32 %v105, %v109
    %vm111 = vweird.f32 %v89
    %vm112 = vweird.f32 %v105
    %vm113 = vmor %vm111, %vm112
    %v114 = vsel %vm113, %v105, %v110
    %v115 = vrsqrt.pop %v90
    %v116 = vmul.f32 %v115, %v90
    %v117 = vmul.f32 %v116, %v115
    %v118 = vmul.f32 0.5, %v117
    %v119 = vsub.f32 1.5, %v118
    %v120 = vmul.f32 %v115, %v119
    %vm121 = vweird.f32 %v90
    %vm122 = vweird.f32 %v115
    %vm123 = vmor %vm121, %vm122
    %v124 = vsel %vm123, %v115, %v120
    %v125 = vrsqrt.pop %v91
    %v126 = vmul.f32 %v125, %v91
    %v127 = vmul.f32 %v126, %v125
    %v128 = vmul.f32 0.5, %v127
    %v129 = vsub.f32 1.5, %v128
    %v130 = vmul.f32 %v125, %v129
    %vm131 = vweird.f32 %v91
    %vm132 = vweird.f32 %v125
    %vm133 = vmor %vm131, %vm132
    %v134 = vsel %vm133, %v125, %v130
    %v135 = vrsqrt.pop %v92
    %v136 = vmul.f32 %v135, %v92
    %v137 = vmul.f32 %v136, %v135
    %v138 = vmul.f32 0.5, %v137
    %v139 = vsub.f32 1.5, %v138
    %v140 = vmul.f32 %v135, %v139
    %vm141 = vweird.f32 %v92
    %vm142 = vweird.f32 %v135
    %vm143 = vmor %vm141, %vm142
    %v144 = vsel %vm143, %v135, %v140
    %v145 = vrsqrt.pop %v93
    %v146 = vmul.f32 %v145, %v93
    %v147 = vmul.f32 %v146, %v145
    %v148 = vmul.f32 0.5, %v147
    %v149 = vsub.f32 1.5, %v148
    %v150 = vmul.f32 %v145, %v149
    %vm151 = vweird.f32 %v93
    %vm152 = vweird.f32 %v145
    %vm153 = vmor %vm151, %vm152
    %v154 = vsel %vm153, %v145, %v150
    %v155 = vrsqrt.pop %v94
    %v156 = vmul.f32 %v155, %v94
    %v157 = vmul.f32 %v156, %v155
    %v158 = vmul.f32 0.5, %v157
    %v159 = vsub.f32 1.5, %v158
    %v160 = vmul.f32 %v155, %v159
    %vm161 = vweird.f32 %v94
    %vm162 = vweird.f32 %v155
    %vm163 = vmor %vm161, %vm162
    %v164 = vsel %vm163, %v155, %v160
    %v165 = vrsqrt.pop %v95
    %v166 = vmul.f32 %v165, %v95
    %v167 = vmul.f32 %v166, %v165
    %v168 = vmul.f32 0.5, %v167
    %v169 = vsub.f32 1.5, %v168
    %v170 = vmul.f32 %v165, %v169
    %vm171 = vweird.f32 %v95
    %vm172 = vweird.f32 %v165
    %vm173 = vmor %vm171, %vm172
    %v174 = vsel %vm173, %v165, %v170
    %v175 = vrsqrt.pop %v96
    %v176 = vmul.f32 %v175, %v96
    %v177 = vmul.f32 %v176, %v175
    %v178 = vmul.f32 0.5, %v177
    %v179 = vsub.f32 1.5, %v178
    %v180 = vmul.f32 %v175, %v179
    %vm181 = vweird.f32 %v96
    %vm182 = vweird.f32 %v175
    %vm183 = vmor %vm181, %vm182
    %v184 = vsel %vm183, %v175, %v180
    %v185 = vrsqrt.pop %v97
    %v186 = vmul.f32 %v185, %v97
    %v187 = vmul.f32 %v186, %v185
    %v188 = vmul.f32 0.5, %v187
    %v189 = vsub.f32 1.5, %v188
    %v190 = vmul.f32 %v185, %v189
    %vm191 = vweird.f32 %v97
    %vm192 = vweird.f32 %v185
    %vm193 = vmor %vm191, %vm192
    %v194 = vsel %vm193, %v185, %v190
    %v195 = vrsqrt.pop %v98
    %v196 = vmul.f32 %v195, %v98
    %v197 = vmul.f32 %v196, %v195
    %v198 = vmul.f32 0.5, %v197
    %v199 = vsub.f32 1.5, %v198
    %v200 = vmul.f32 %v195, %v199
    %vm201 = vweird.f32 %v98
    %vm202 = vweird.f32 %v195
    %vm203 = vmor %vm201, %vm202
    %v204 = vsel %vm203, %v195, %v200
    %v205 = vrsqrt.pop %v99
    %v206 = vmul.f32 %v205, %v99
    %v207 = vmul.f32 %v206, %v205
    %v208 = vmul.f32 0.5, %v207
    %v209 = vsub.f32 1.5, %v208
    %v210 = vmul.f32 %v205, %v209
    %vm211 = vweird.f32 %v99
    %vm212 = vweird.f32 %v205
    %vm213 = vmor %vm211, %vm212
    %v214 = vsel %vm213, %v205, %v210
    %v215 = vrsqrt.pop %v100
    %v216 = vmul.f32 %v215, %v100
    %v217 = vmul.f32 %v216, %v215
    %v218 = vmul.f32 0.5, %v217
    %v219 = vsub.f32 1.5, %v218
    %v220 = vmul.f32 %v215, %v219
    %vm221 = vweird.f32 %v100
    %vm222 = vweird.f32 %v215
    %vm223 = vmor %vm221, %vm222
    %v224 = vsel %vm223, %v215, %v220
    %v225 = vrsqrt.pop %v101
    %v226 = vmul.f32 %v225, %v101
    %v227 = vmul.f32 %v226, %v225
    %v228 = vmul.f32 0.5, %v227
    %v229 = vsub.f32 1.5, %v228
    %v230 = vmul.f32 %v225, %v229
    %vm231 = vweird.f32 %v101
    %vm232 = vweird.f32 %v225
    %vm233 = vmor %vm231, %vm232
    %v234 = vsel %vm233, %v225, %v230
    %v235 = vrsqrt.pop %v102
    %v236 = vmul.f32 %v235, %v102
    %v237 = vmul.f32 %v236, %v235
    %v238 = vmul.f32 0.5, %v237
    %v239 = vsub.f32 1.5, %v238
    %v240 = vmul.f32 %v235, %v239
    %vm241 = vweird.f32 %v102
    %vm242 = vweird.f32 %v235
    %vm243 = vmor %vm241, %vm242
    %v244 = vsel %vm243, %v235, %v240
    %v245 = vrsqrt.pop %v103
    %v246 = vmul.f32 %v245, %v103
    %v247 = vmul.f32 %v246, %v245
    %v248 = vmul.f32 0.5, %v247
    %v249 = vsub.f32 1.5, %v248
    %v250 = vmul.f32 %v245, %v249
    %vm251 = vweird.f32 %v103
    %vm252 = vweird.f32 %v245
    %vm253 = vmor %vm251, %vm252
    %v254 = vsel %vm253, %v245, %v250
    %v255 = vrsqrt.pop %v104
    %v256 = vmul.f32 %v255, %v104
    %v257 = vmul.f32 %v256, %v255
    %v258 = vmul.f32 0.5, %v257
    %v259 = vsub.f32 1.5, %v258
    %v260 = vmul.f32 %v255, %v259
    %vm261 = vweird.f32 %v104
    %vm262 = vweird.f32 %v255
    %vm263 = vmor %vm261, %vm262
    %v264 = vsel %vm263, %v255, %v260
    %v265 = vmul.f32 %v25, %v114
    %v266 = vmul.f32 %v26, %v124
    %v267 = vmul.f32 %v27, %v134
    %v268 = vmul.f32 %v28, %v144
    %v269 = vmul.f32 %v29, %v154
    %v270 = vmul.f32 %v30, %v164
    %v271 = vmul.f32 %v31, %v174
    %v272 = vmul.f32 %v32, %v184
    %v273 = vmul.f32 %v33, %v194
    %v274 = vmul.f32 %v34, %v204
    %v275 = vmul.f32 %v35, %v214
    %v276 = vmul.f32 %v36, %v224
    %v277 = vmul.f32 %v37, %v234
    %v278 = vmul.f32 %v38, %v244
    %v279 = vmul.f32 %v39, %v254
    %v280 = vmul.f32 %v40, %v264
    %281 = vxpose.xlu0.b32.start [1/16] %v265, 128
    %282 = vxpose.xlu0.b32.cont [2/16] %v266, 128
    %283 = vxpose.xlu0.b32.cont [3/16] %v267, 128
    %284 = vxpose.xlu0.b32.cont [4/16] %v268, 128
    %285 = vxpose.xlu0.b32.cont [5/16] %v269, 128
    %286 = vxpose.xlu0.b32.cont [6/16] %v270, 128
    %287 = vxpose.xlu0.b32.cont [7/16] %v271, 128
    %288 = vxpose.xlu0.b32.cont [8/16] %v272, 128
    %289 = vxpose.xlu0.b32.cont [9/16] %v273, 128
    %290 = vxpose.xlu0.b32.cont [10/16] %v274, 128
    %291 = vxpose.xlu0.b32.cont [11/16] %v275, 128
    %292 = vxpose.xlu0.b32.cont [12/16] %v276, 128
    %293 = vxpose.xlu0.b32.cont [13/16] %v277, 128
    %294 = vxpose.xlu0.b32.cont [14/16] %v278, 128
    %295 = vxpose.xlu0.b32.cont [15/16] %v279, 128
    %296 = vxpose.xlu0.b32.end [16/16] %v280, 128
    %v297 = vpop.trf.xlu0
    %v298 = vpop.trf.xlu0
    %v299 = vpop.trf.xlu0
    %v300 = vpop.trf.xlu0
    %v301 = vpop.trf.xlu0
    %v302 = vpop.trf.xlu0
    %v303 = vpop.trf.xlu0
    %v304 = vpop.trf.xlu0
    %v305 = vpop.trf.xlu0
    %v306 = vpop.trf.xlu0
    %v307 = vpop.trf.xlu0
    %v308 = vpop.trf.xlu0
    %v309 = vpop.trf.xlu0
    %v310 = vpop.trf.xlu0
    %v311 = vpop.trf.xlu0
    %v312 = vpop.trf.xlu0
    %313 = vst [vmem:[#allocation5] sm:$0xff] %v297
    %314 = vst [vmem:[#allocation5 + $0x8] sm:$0xff] %v298
    %315 = vst [vmem:[#allocation5 + $0x10] sm:$0xff] %v299
    %316 = vst [vmem:[#allocation5 + $0x18] sm:$0xff] %v300
    %317 = vst [vmem:[#allocation5 + $0x20] sm:$0xff] %v301
    %318 = vst [vmem:[#allocation5 + $0x28] sm:$0xff] %v302
    %319 = vst [vmem:[#allocation5 + $0x30] sm:$0xff] %v303
    %320 = vst [vmem:[#allocation5 + $0x38] sm:$0xff] %v304
    %321 = vst [vmem:[#allocation5 + $0x40] sm:$0xff] %v305
    %322 = vst [vmem:[#allocation5 + $0x48] sm:$0xff] %v306
    %323 = vst [vmem:[#allocation5 + $0x50] sm:$0xff] %v307
    %324 = vst [vmem:[#allocation5 + $0x58] sm:$0xff] %v308
    %325 = vst [vmem:[#allocation5 + $0x60] sm:$0xff] %v309
    %326 = vst [vmem:[#allocation5 + $0x68] sm:$0xff] %v310
    %327 = vst [vmem:[#allocation5 + $0x70] sm:$0xff] %v311
    %328 = vst [vmem:[#allocation5 + $0x78] sm:$0xff] %v312
    // Predicated region
    $region10: #{tpu_custom_call.1} parent=1 // pred_check
      _
    $region11: #{tpu_custom_call.1} parent=1 // pred_check_branch
      %330 = sbr.rel (0) target = $region13
    $region12: #{tpu_custom_call.1} parent=1 // pred_region
      %332 = vsyncadd [#allocation4], 0
      %s333 = sshll.u32 [#allocation5], 4
      %s334 = int_to_ptr.vmem [resolvable:$true] %s333
      %s335 = sshll.u32 %s1, 4
      %s336 = int_to_ptr.hbm [resolvable:$true] %s335
      %341 = dma.vmem_to_hbm [thread:$0]  %s334, 2048, %s336, [#allocation4], 128, 128, 8
    $region13: #{tpu_custom_call.1} parent=1 // pred_fallthru
      _
    // Predicated region
    $region14: #{tpu_custom_call.1} parent=1 // pred_check
      _
    $region15: #{tpu_custom_call.1} parent=1 // pred_check_branch
      %343 = sbr.rel (0) target = $region17
    $region16: #{tpu_custom_call.1} parent=1 // pred_region
      %345 = dma.done [#allocation4], 2048
    $region17: #{tpu_custom_call.1} parent=1 // pred_fallthru
      _
    %346 = vsyncpa [#allocation3], 1
    %347 = vsyncpa [#allocation4], 1

</llo_original>
